<compile_context>
chip_gen: v5e
topology: v5e:2x2
jax: 0.10.0
libtpu: 0.0.40
codegen_flags: <defaults>
</compile_context>

<pallas_src>
import jax
import jax.numpy as jnp
from jax.experimental import pallas as pl
from jax.experimental.pallas import tpu as pltpu


# ---------------------------------------------------------------------------
# Helpers
# ---------------------------------------------------------------------------
def _vmem_limit_bytes():
    """Generation-aware scoped-VMEM limit: ~75% of physical, capped at 100 MiB
    (v7x: 64 MiB physical -> 48 MiB; v5e/v6e: 128 MiB -> 96 MiB)."""
    cap = 64 * 1024 * 1024
    try:
        info = pltpu.get_tpu_info()
        cap = int(getattr(info, "vmem_capacity_bytes", cap))
    except Exception:
        pass
    return min((cap * 3) // 4, 100 * 1024 * 1024)


def _pick_tile(dim, preferred, granularity):
    """Largest tile <= preferred that divides dim and is a multiple of
    granularity; falls back to the full dimension (always a legal block)."""
    # TODO(synk): for awkward huge dims that nothing divides, switch to a
    # pl.cdiv grid with explicit edge masking instead of a full-dim fallback.
    if dim <= preferred:
        return dim
    t = (preferred // granularity) * granularity
    while t >= granularity:
        if dim % t == 0:
            return t
        t -= granularity
    return dim


# ---------------------------------------------------------------------------
# Kernels
# ---------------------------------------------------------------------------
def _a_pass_single_kernel(w_ref, b_ref, r_ref, a_ref):
    # A = W * R + B, written exactly once per (i, k) block.
    a_ref[...] = (w_ref[...] * r_ref[...] + b_ref[...]).astype(a_ref.dtype)


def _a_pass_dual_kernel(w_ref, b_ref, r_ref, a_out_ref, a_mm_ref):
    # Same as above, but also emit a bf16 copy for the MXU (halves LHS bytes
    # re-read by the matmul pass).
    a = w_ref[...] * r_ref[...] + b_ref[...]
    a_out_ref[...] = a.astype(a_out_ref.dtype)
    a_mm_ref[...] = a.astype(a_mm_ref.dtype)


def _bmat_pass_kernel(ni_ref, idx_ref, g_ref, u_ref, bmat_ref):
    # Bmat = ni[i] * G + U, written exactly once per (k, j) block, in the
    # matmul dtype. ni[i] is a dynamic scalar read from SMEM (scalar prefetch).
    ni_i = ni_ref[idx_ref[0]]
    bmat_ref[...] = (ni_i * g_ref[...] + u_ref[...]).astype(bmat_ref.dtype)


def _matmul_kernel(a_ref, b_ref, q_ref, acc_ref):
    k = pl.program_id(2)

    @pl.when(k == 0)
    def _():
        acc_ref[...] = jnp.zeros_like(acc_ref)

    acc_ref[...] += jnp.dot(a_ref[...], b_ref[...],
                            preferred_element_type=jnp.float32)

    @pl.when(k == pl.num_programs(2) - 1)
    def _():
        q_ref[...] = acc_ref[...].astype(q_ref.dtype)


# ---------------------------------------------------------------------------
# Wrapper
# ---------------------------------------------------------------------------
def updating_q_layer_2(W, B, ni, G_m_i, U_m_i, R_m_i, i, *,
                       tm=None, tn=None, tk=512, use_bf16_matmul=True):
    """Pallas equivalent of Updating_Q_Layer_2.forward(G_m_i, U_m_i, R_m_i, i)."""
    M, K = W.shape
    K2, N = G_m_i.shape
    assert K == K2, "inner dimensions must match for A @ Bmat"
    assert B.shape == (M, K) and R_m_i.shape == (M, K) and U_m_i.shape == (K, N)

    out_dtype = W.dtype
    matmul_dtype = jnp.bfloat16 if use_bf16_matmul else jnp.float32
    need_mm_copy = jnp.dtype(matmul_dtype) != jnp.dtype(out_dtype)

    vmem_limit = _vmem_limit_bytes()
    big_vmem = vmem_limit >= 72 * 1024 * 1024   # v5e / v6e (128 MiB physical)
    if tm is None:
        tm = 1024 if big_vmem else 512
    if tn is None:
        tn = 1024 if big_vmem else 512

    ni_arr = jnp.asarray(ni, dtype=jnp.float32).reshape(-1)
    idx = jnp.asarray(i, dtype=jnp.int32).reshape(1)

    # ---- Pass 1: A = W*R + B (each (i,k) block visited exactly once) --------
    tm_a = _pick_tile(M, 512, 8)
    tk_a = _pick_tile(K, 512, 128)
    a_spec = pl.BlockSpec((tm_a, tk_a), lambda i_, k_: (i_, k_))
    a_params = pltpu.CompilerParams(
        dimension_semantics=("parallel", "parallel"),
        vmem_limit_bytes=vmem_limit)

    if need_mm_copy:
        a_out, a_mm = pl.pallas_call(
            _a_pass_dual_kernel,
            grid=(M // tm_a, K // tk_a),
            in_specs=[a_spec, a_spec, a_spec],
            out_specs=(a_spec, a_spec),
            out_shape=(jax.ShapeDtypeStruct((M, K), out_dtype),
                       jax.ShapeDtypeStruct((M, K), matmul_dtype)),
            compiler_params=a_params,
        )(W, B, R_m_i)
    else:
        a_out = pl.pallas_call(
            _a_pass_single_kernel,
            grid=(M // tm_a, K // tk_a),
            in_specs=[a_spec, a_spec, a_spec],
            out_specs=a_spec,
            out_shape=jax.ShapeDtypeStruct((M, K), out_dtype),
            compiler_params=a_params,
        )(W, B, R_m_i)
        a_mm = a_out

    # ---- Pass 2: Bmat = ni[i]*G + U, emitted once in the matmul dtype -------
    tk_b = _pick_tile(K, 512, 8)
    tn_b = _pick_tile(N, 512, 128)
    b_spec = pl.BlockSpec((tk_b, tn_b), lambda k_, j_, *_: (k_, j_))
    bmat = pl.pallas_call(
        _bmat_pass_kernel,
        grid_spec=pltpu.PrefetchScalarGridSpec(
            num_scalar_prefetch=2,
            grid=(K // tk_b, N // tn_b),
            in_specs=[b_spec, b_spec],
            out_specs=b_spec,
        ),
        out_shape=jax.ShapeDtypeStruct((K, N), matmul_dtype),
        compiler_params=pltpu.CompilerParams(
            dimension_semantics=("parallel", "parallel"),
            vmem_limit_bytes=vmem_limit),
    )(ni_arr, idx, G_m_i, U_m_i)

    # ---- Pass 3: Q = A @ Bmat (plain tiled MXU matmul, f32 accumulation) ----
    gm = 128 if M % 128 == 0 else 8          # MXU-aligned tm when possible
    tm_m = _pick_tile(M, tm, gm)
    tn_m = _pick_tile(N, tn, 128)
    tk_m = _pick_tile(K, tk, 128)
    grid = (M // tm_m, N // tn_m, K // tk_m)

    mm_item = jnp.dtype(matmul_dtype).itemsize
    out_item = jnp.dtype(out_dtype).itemsize
    cost = pl.CostEstimate(
        flops=2 * M * N * K,
        transcendentals=0,
        bytes_accessed=(mm_item * (M * K * (N // tn_m) + K * N * (M // tm_m))
                        + out_item * M * N),
    )

    q = pl.pallas_call(
        _matmul_kernel,
        grid=grid,
        in_specs=[pl.BlockSpec((tm_m, tk_m), lambda i_, j_, k_: (i_, k_)),
                  pl.BlockSpec((tk_m, tn_m), lambda i_, j_, k_: (k_, j_))],
        out_specs=pl.BlockSpec((tm_m, tn_m), lambda i_, j_, k_: (i_, j_)),
        out_shape=jax.ShapeDtypeStruct((M, N), out_dtype),
        scratch_shapes=[pltpu.VMEM((tm_m, tn_m), jnp.float32)],
        compiler_params=pltpu.CompilerParams(
            # A is produced in pass 1, so both non-reduction axes are safely
            # parallel (megacore sharding on v7x).
            dimension_semantics=("parallel", "parallel", "arbitrary"),
            vmem_limit_bytes=vmem_limit),
        cost_estimate=cost,
    )(a_mm, bmat)

    return q, a_out


# ---------------------------------------------------------------------------
# Self-test
# ---------------------------------------------------------------------------
if __name__ == "__main__":
    key = jax.random.PRNGKey(0)
    kW, kB, kni, kG, kU, kR = jax.random.split(key, 6)

    # Small shapes consistent with the module's (M,K) @ (K,N) matmul.
    M, K, N = 256, 384, 384
    n_layers = 4
    layer_i = 2

    W = jax.random.normal(kW, (M, K), dtype=jnp.float32)
    Bp = jax.random.normal(kB, (M, K), dtype=jnp.float32)
    ni = jax.random.uniform(kni, (n_layers,), dtype=jnp.float32)
    G_m_i = jax.random.normal(kG, (K, N), dtype=jnp.float32)
    U_m_i = jax.random.normal(kU, (K, N), dtype=jnp.float32)
    R_m_i = jax.random.normal(kR, (M, K), dtype=jnp.float32)

    # Small explicit matmul tiles so the test exercises a real (2, 3, 3) grid
    # with K-reduction accumulator init/flush gating.
    Q, R_new = updating_q_layer_2(W, Bp, ni, G_m_i, U_m_i, R_m_i, layer_i,
                                  tm=128, tn=128, tk=128)
    Q = jax.block_until_ready(Q)
    R_new = jax.block_until_ready(R_new)

    # References: exact module semantics (f32) and the bf16-MXU equivalent.
    A_ref = W * R_m_i + Bp
    Bmat_ref = ni[layer_i] * G_m_i + U_m_i
    Q_f32 = A_ref @ Bmat_ref
    Q_bf16 = jnp.dot(A_ref.astype(jnp.bfloat16), Bmat_ref.astype(jnp.bfloat16),
                     preferred_element_type=jnp.float32)

    assert jnp.allclose(R_new, A_ref, atol=1e-5, rtol=1e-5), "R_m_i mismatch"
    assert jnp.allclose(Q, Q_bf16, atol=5e-2, rtol=5e-2), "Q mismatch (bf16 ref)"
    assert jnp.allclose(Q, Q_f32, atol=2.0, rtol=5e-2), "Q mismatch (f32 ref)"

    # TODO(synk): if the caller loops this layer over all i, batch the layer
    # index into a leading grid axis so one pallas_call amortizes launch cost.

    print("KERNEL_OK")
</pallas_src>

<mosaic_0001>
module attributes {stable_mosaic.version = 11 : i64} {
  func.func @_a_pass_dual_kernel(%arg0: i32, %arg1: i32, %arg2: memref<256x384xf32, #tpu.memory_space<vmem>>, %arg3: memref<256x384xf32, #tpu.memory_space<vmem>>, %arg4: memref<256x384xf32, #tpu.memory_space<vmem>>, %arg5: memref<256x384xf32, #tpu.memory_space<vmem>>, %arg6: memref<256x384xbf16, #tpu.memory_space<vmem>>) attributes {dimension_semantics = [#tpu.dimension_semantics<parallel>, #tpu.dimension_semantics<parallel>], iteration_bounds = array<i64: 1, 1>, scalar_prefetch = 0 : i64, scratch_operands = 0 : i64, tpu.core_type = #tpu.core_type<tc>, window_params = [{transform_indices = @transform_0, window_bounds = array<i64: 256, 384>}, {transform_indices = @transform_1, window_bounds = array<i64: 256, 384>}, {transform_indices = @transform_2, window_bounds = array<i64: 256, 384>}, {transform_indices = @transform_3, window_bounds = array<i64: 256, 384>}, {transform_indices = @transform_4, window_bounds = array<i64: 256, 384>}]} {
    %c0 = arith.constant 0 : index
    %c0_0 = arith.constant 0 : index
    %0 = vector.load %arg2[%c0, %c0_0] : memref<256x384xf32, #tpu.memory_space<vmem>>, vector<256x384xf32>
    %c0_1 = arith.constant 0 : index
    %c0_2 = arith.constant 0 : index
    %1 = vector.load %arg4[%c0_1, %c0_2] : memref<256x384xf32, #tpu.memory_space<vmem>>, vector<256x384xf32>
    %2 = arith.mulf %0, %1 : vector<256x384xf32>
    %c0_3 = arith.constant 0 : index
    %c0_4 = arith.constant 0 : index
    %3 = vector.load %arg3[%c0_3, %c0_4] : memref<256x384xf32, #tpu.memory_space<vmem>>, vector<256x384xf32>
    %4 = arith.addf %2, %3 : vector<256x384xf32>
    %c0_5 = arith.constant 0 : index
    %c0_6 = arith.constant 0 : index
    %5 = vector.load %arg5[%c0_5, %c0_6] : memref<256x384xf32, #tpu.memory_space<vmem>>, vector<256x384xf32>
    tpu.vector_store %arg5[%c0_5, %c0_6], %4 {strides = array<i32>} : memref<256x384xf32, #tpu.memory_space<vmem>>, vector<256x384xf32>,
    %6 = arith.truncf %4 : vector<256x384xf32> to vector<256x384xbf16>
    %c0_7 = arith.constant 0 : index
    %c0_8 = arith.constant 0 : index
    %7 = vector.load %arg6[%c0_7, %c0_8] : memref<256x384xbf16, #tpu.memory_space<vmem>>, vector<256x384xbf16>
    tpu.vector_store %arg6[%c0_7, %c0_8], %6 {strides = array<i32>} : memref<256x384xbf16, #tpu.memory_space<vmem>>, vector<256x384xbf16>,
    return
  }
  func.func @transform_0(%arg0: i32, %arg1: i32) -> (i32, i32) {
    %c0_i32 = arith.constant 0 : i32
    return %arg0, %arg1 : i32, i32
  }
  func.func @transform_1(%arg0: i32, %arg1: i32) -> (i32, i32) {
    %c0_i32 = arith.constant 0 : i32
    return %arg0, %arg1 : i32, i32
  }
  func.func @transform_2(%arg0: i32, %arg1: i32) -> (i32, i32) {
    %c0_i32 = arith.constant 0 : i32
    return %arg0, %arg1 : i32, i32
  }
  func.func @transform_3(%arg0: i32, %arg1: i32) -> (i32, i32) {
    %c0_i32 = arith.constant 0 : i32
    return %arg0, %arg1 : i32, i32
  }
  func.func @transform_4(%arg0: i32, %arg1: i32) -> (i32, i32) {
    %c0_i32 = arith.constant 0 : i32
    return %arg0, %arg1 : i32, i32
  }
}

</mosaic_0001>

<llo_original>
// kernel: tpu_custom_call.1
$region0: #{tpu_custom_call.1}
  #allocation0 [shape = 'u32[]', space=smem, size = 0x4, offset = 0x4, fixed_abs, tag = 'smem constant byte address 0x4 - core index']
  #allocation1 [shape = 'u32[72,128]{1,0:T(1,128)}', space=vmem, size = 0x9000, scoped, tag = 'internal scratch']
  %s0 = inlined_call_operand.hbm [shape: f32[256,384], index: 0, kind: input, shape index: {}]
  %s1 = inlined_call_operand.hbm [shape: f32[256,384], index: 1, kind: input, shape index: {}]
  %s2 = inlined_call_operand.hbm [shape: f32[256,384], index: 2, kind: input, shape index: {}]
  %s3 = inlined_call_operand.hbm [shape: f32[256,384], index: 3, kind: output, shape index: {0}]
  %s4 = inlined_call_operand.hbm [shape: bf16[256,384], index: 4, kind: output, shape index: {1}]
  %5 = xla_tuple %s3, %s4
  %s6 = sld [smem:[#allocation0]]
  $region42: #{tpu_custom_call.1} parent=0
    _
  %s8 = ssub.s32 1, %s6
  %s9 = scalar_select 0, %s8, %s6
  $region1: #{tpu_custom_call.1} parent=0
    #allocation2 [shape = 'u8[393216]{0}', space=vmem, size = 0x60000, scoped, tag = 'input window, operand 0, single buffered']
    #allocation3 [shape = 's32[1]{0}', space=sflag, size = 0x4, scoped, tag = 'scoped memory for tpu_custom_call.1']
    #allocation4 [shape = 's32[1]{0}', space=sflag, size = 0x4, scoped, tag = 'scoped memory for tpu_custom_call.1']
    #allocation5 [shape = 'u8[393216]{0}', space=vmem, size = 0x60000, scoped, tag = 'input window, operand 1, single buffered']
    #allocation6 [shape = 's32[1]{0}', space=sflag, size = 0x4, scoped, tag = 'scoped memory for tpu_custom_call.1']
    #allocation7 [shape = 'u8[393216]{0}', space=vmem, size = 0x60000, scoped, tag = 'input window, operand 2, single buffered']
    #allocation8 [shape = 'u8[393216]{0}', space=vmem, size = 0x60000, scoped, tag = 'output window, operand 0, single buffered']
    #allocation9 [shape = 'u8[196608]{0}', space=vmem, size = 0x30000, scoped, tag = 'output window, operand 1, single buffered']
    #allocation10 [shape = 's32[1]{0}', space=sflag, size = 0x4, scoped, tag = 'scoped memory for tpu_custom_call.1']
    %10 = vsyncpa [#allocation3], 0
    %11 = vsyncpa [#allocation6], 0
    %12 = vsyncpa [#allocation4], 0
    %13 = vsyncpa [#allocation10], 0
    // Predicated region
    $region2: #{tpu_custom_call.1} parent=1 // pred_check
      _
    $region3: #{tpu_custom_call.1} parent=1 // pred_check_branch
      %15 = sbr.rel (0) target = $region5
    $region4: #{tpu_custom_call.1} parent=1 // pred_region
      %17 = vsyncadd [#allocation3], 0
      %s18 = sshll.u32 %s0, 4
      %s19 = int_to_ptr.hbm [resolvable:$true] %s18
      %s20 = sshll.u32 [#allocation2], 4
      %s21 = int_to_ptr.vmem [resolvable:$true] %s20
      %26 = dma.hbm_to_vmem [thread:$0]  %s19, 12288, %s21, [#allocation3], 384, 384, 24
    $region5: #{tpu_custom_call.1} parent=1 // pred_fallthru
      _
    // Predicated region
    $region6: #{tpu_custom_call.1} parent=1 // pred_check
      _
    $region7: #{tpu_custom_call.1} parent=1 // pred_check_branch
      %28 = sbr.rel (0) target = $region9
    $region8: #{tpu_custom_call.1} parent=1 // pred_region
      %30 = vsyncadd [#allocation6], 0
      %s31 = sshll.u32 %s1, 4
      %s32 = int_to_ptr.hbm [resolvable:$true] %s31
      %s33 = sshll.u32 [#allocation5], 4
      %s34 = int_to_ptr.vmem [resolvable:$true] %s33
      %39 = dma.hbm_to_vmem [thread:$0]  %s32, 12288, %s34, [#allocation6], 384, 384, 24
    $region9: #{tpu_custom_call.1} parent=1 // pred_fallthru
      _
    // Predicated region
    $region10: #{tpu_custom_call.1} parent=1 // pred_check
      _
    $region11: #{tpu_custom_call.1} parent=1 // pred_check_branch
      %41 = sbr.rel (0) target = $region13
    $region12: #{tpu_custom_call.1} parent=1 // pred_region
      %43 = vsyncadd [#allocation6], 0
      %s44 = sshll.u32 %s2, 4
      %s45 = int_to_ptr.hbm [resolvable:$true] %s44
      %s46 = sshll.u32 [#allocation7], 4
      %s47 = int_to_ptr.vmem [resolvable:$true] %s46
      %52 = dma.hbm_to_vmem [thread:$0]  %s45, 12288, %s47, [#allocation6], 384, 384, 24
    $region13: #{tpu_custom_call.1} parent=1 // pred_fallthru
      _
    // Predicated region
    $region14: #{tpu_custom_call.1} parent=1 // pred_check
      _
    $region15: #{tpu_custom_call.1} parent=1 // pred_check_branch
      %54 = sbr.rel (0) target = $region17
    $region16: #{tpu_custom_call.1} parent=1 // pred_region
      %56 = dma.done [#allocation3], 12288
    $region17: #{tpu_custom_call.1} parent=1 // pred_fallthru
      _
    // Predicated region
    $region18: #{tpu_custom_call.1} parent=1 // pred_check
      _
    $region19: #{tpu_custom_call.1} parent=1 // pred_check_branch
      %58 = sbr.rel (0) target = $region21
    $region20: #{tpu_custom_call.1} parent=1 // pred_region
      %60 = dma.done [#allocation6], 12288
    $region21: #{tpu_custom_call.1} parent=1 // pred_fallthru
      _
    // Predicated region
    $region22: #{tpu_custom_call.1} parent=1 // pred_check
      _
    $region23: #{tpu_custom_call.1} parent=1 // pred_check_branch
      %62 = sbr.rel (0) target = $region25
    $region24: #{tpu_custom_call.1} parent=1 // pred_region
      %64 = dma.done [#allocation6], 12288
    $region25: #{tpu_custom_call.1} parent=1 // pred_fallthru
      _
    %v65 = vld [vmem:[#allocation2] sm:$0xff]
    %v66 = vld [vmem:[#allocation2 + $0x8] sm:$0xff]
    %v67 = vld [vmem:[#allocation2 + $0x10] sm:$0xff]
    %v68 = vld [vmem:[#allocation2 + $0x18] sm:$0xff]
    %v69 = vld [vmem:[#allocation2 + $0x20] sm:$0xff]
    %v70 = vld [vmem:[#allocation2 + $0x28] sm:$0xff]
    %v71 = vld [vmem:[#allocation2 + $0x30] sm:$0xff]
    %v72 = vld [vmem:[#allocation2 + $0x38] sm:$0xff]
    %v73 = vld [vmem:[#allocation2 + $0x40] sm:$0xff]
    %v74 = vld [vmem:[#allocation2 + $0x48] sm:$0xff]
    %v75 = vld [vmem:[#allocation2 + $0x50] sm:$0xff]
    %v76 = vld [vmem:[#allocation2 + $0x58] sm:$0xff]
    %v77 = vld [vmem:[#allocation2 + $0x60] sm:$0xff]
    %v78 = vld [vmem:[#allocation2 + $0x68] sm:$0xff]
    %v79 = vld [vmem:[#allocation2 + $0x70] sm:$0xff]
    %v80 = vld [vmem:[#allocation2 + $0x78] sm:$0xff]
    %v81 = vld [vmem:[#allocation2 + $0x80] sm:$0xff]
    %v82 = vld [vmem:[#allocation2 + $0x88] sm:$0xff]
    %v83 = vld [vmem:[#allocation2 + $0x90] sm:$0xff]
    %v84 = vld [vmem:[#allocation2 + $0x98] sm:$0xff]
    %v85 = vld [vmem:[#allocation2 + $0xa0] sm:$0xff]
    %v86 = vld [vmem:[#allocation2 + $0xa8] sm:$0xff]
    %v87 = vld [vmem:[#allocation2 + $0xb0] sm:$0xff]
    %v88 = vld [vmem:[#allocation2 + $0xb8] sm:$0xff]
    %v89 = vld [vmem:[#allocation2 + $0xc0] sm:$0xff]
    %v90 = vld [vmem:[#allocation2 + $0xc8] sm:$0xff]
    %v91 = vld [vmem:[#allocation2 + $0xd0] sm:$0xff]
    %v92 = vld [vmem:[#allocation2 + $0xd8] sm:$0xff]
    %v93 = vld [vmem:[#allocation2 + $0xe0] sm:$0xff]
    %v94 = vld [vmem:[#allocation2 + $0xe8] sm:$0xff]
    %v95 = vld [vmem:[#allocation2 + $0xf0] sm:$0xff]
    %v96 = vld [vmem:[#allocation2 + $0xf8] sm:$0xff]
    %v97 = vld [vmem:[#allocation2 + $0x100] sm:$0xff]
    %v98 = vld [vmem:[#allocation2 + $0x108] sm:$0xff]
    %v99 = vld [vmem:[#allocation2 + $0x110] sm:$0xff]
    %v100 = vld [vmem:[#allocation2 + $0x118] sm:$0xff]
    %v101 = vld [vmem:[#allocation2 + $0x120] sm:$0xff]
    %v102 = vld [vmem:[#allocation2 + $0x128] sm:$0xff]
    %v103 = vld [vmem:[#allocation2 + $0x130] sm:$0xff]
    %v104 = vld [vmem:[#allocation2 + $0x138] sm:$0xff]
    %v105 = vld [vmem:[#allocation2 + $0x140] sm:$0xff]
    %v106 = vld [vmem:[#allocation2 + $0x148] sm:$0xff]
    %v107 = vld [vmem:[#allocation2 + $0x150] sm:$0xff]
    %v108 = vld [vmem:[#allocation2 + $0x158] sm:$0xff]
    %v109 = vld [vmem:[#allocation2 + $0x160] sm:$0xff]
    %v110 = vld [vmem:[#allocation2 + $0x168] sm:$0xff]
    %v111 = vld [vmem:[#allocation2 + $0x170] sm:$0xff]
    %v112 = vld [vmem:[#allocation2 + $0x178] sm:$0xff]
    %v113 = vld [vmem:[#allocation2 + $0x180] sm:$0xff]
    %v114 = vld [vmem:[#allocation2 + $0x188] sm:$0xff]
    %v115 = vld [vmem:[#allocation2 + $0x190] sm:$0xff]
    %v116 = vld [vmem:[#allocation2 + $0x198] sm:$0xff]
    %v117 = vld [vmem:[#allocation2 + $0x1a0] sm:$0xff]
    %v118 = vld [vmem:[#allocation2 + $0x1a8] sm:$0xff]
    %v119 = vld [vmem:[#allocation2 + $0x1b0] sm:$0xff]
    %v120 = vld [vmem:[#allocation2 + $0x1b8] sm:$0xff]
    %v121 = vld [vmem:[#allocation2 + $0x1c0] sm:$0xff]
    %v122 = vld [vmem:[#allocation2 + $0x1c8] sm:$0xff]
    %v123 = vld [vmem:[#allocation2 + $0x1d0] sm:$0xff]
    %v124 = vld [vmem:[#allocation2 + $0x1d8] sm:$0xff]
    %v125 = vld [vmem:[#allocation2 + $0x1e0] sm:$0xff]
    %v126 = vld [vmem:[#allocation2 + $0x1e8] sm:$0xff]
    %v127 = vld [vmem:[#allocation2 + $0x1f0] sm:$0xff]
    %v128 = vld [vmem:[#allocation2 + $0x1f8] sm:$0xff]
    %v129 = vld [vmem:[#allocation2 + $0x200] sm:$0xff]
    %v130 = vld [vmem:[#allocation2 + $0x208] sm:$0xff]
    %v131 = vld [vmem:[#allocation2 + $0x210] sm:$0xff]
    %v132 = vld [vmem:[#allocation2 + $0x218] sm:$0xff]
    %v133 = vld [vmem:[#allocation2 + $0x220] sm:$0xff]
    %v134 = vld [vmem:[#allocation2 + $0x228] sm:$0xff]
    %v135 = vld [vmem:[#allocation2 + $0x230] sm:$0xff]
    %v136 = vld [vmem:[#allocation2 + $0x238] sm:$0xff]
    %v137 = vld [vmem:[#allocation2 + $0x240] sm:$0xff]
    %v138 = vld [vmem:[#allocation2 + $0x248] sm:$0xff]
    %v139 = vld [vmem:[#allocation2 + $0x250] sm:$0xff]
    %v140 = vld [vmem:[#allocation2 + $0x258] sm:$0xff]
    %v141 = vld [vmem:[#allocation2 + $0x260] sm:$0xff]
    %v142 = vld [vmem:[#allocation2 + $0x268] sm:$0xff]
    %v143 = vld [vmem:[#allocation2 + $0x270] sm:$0xff]
    %v144 = vld [vmem:[#allocation2 + $0x278] sm:$0xff]
    %v145 = vld [vmem:[#allocation2 + $0x280] sm:$0xff]
    %v146 = vld [vmem:[#allocation2 + $0x288] sm:$0xff]
    %v147 = vld [vmem:[#allocation2 + $0x290] sm:$0xff]
    %v148 = vld [vmem:[#allocation2 + $0x298] sm:$0xff]
    %v149 = vld [vmem:[#allocation2 + $0x2a0] sm:$0xff]
    %v150 = vld [vmem:[#allocation2 + $0x2a8] sm:$0xff]
    %v151 = vld [vmem:[#allocation2 + $0x2b0] sm:$0xff]
    %v152 = vld [vmem:[#allocation2 + $0x2b8] sm:$0xff]
    %v153 = vld [vmem:[#allocation2 + $0x2c0] sm:$0xff]
    %v154 = vld [vmem:[#allocation2 + $0x2c8] sm:$0xff]
    %v155 = vld [vmem:[#allocation2 + $0x2d0] sm:$0xff]
    %v156 = vld [vmem:[#allocation2 + $0x2d8] sm:$0xff]
    %v157 = vld [vmem:[#allocation2 + $0x2e0] sm:$0xff]
    %v158 = vld [vmem:[#allocation2 + $0x2e8] sm:$0xff]
    %v159 = vld [vmem:[#allocation2 + $0x2f0] sm:$0xff]
    %v160 = vld [vmem:[#allocation2 + $0x2f8] sm:$0xff]
    %v161 = vld [vmem:[#allocation7] sm:$0xff]
    %v162 = vld [vmem:[#allocation7 + $0x8] sm:$0xff]
    %v163 = vld [vmem:[#allocation7 + $0x10] sm:$0xff]
    %v164 = vld [vmem:[#allocation7 + $0x18] sm:$0xff]
    %v165 = vld [vmem:[#allocation7 + $0x20] sm:$0xff]
    %v166 = vld [vmem:[#allocation7 + $0x28] sm:$0xff]
    %v167 = vld [vmem:[#allocation7 + $0x30] sm:$0xff]
    %v168 = vld [vmem:[#allocation7 + $0x38] sm:$0xff]
    %v169 = vld [vmem:[#allocation7 + $0x40] sm:$0xff]
    %v170 = vld [vmem:[#allocation7 + $0x48] sm:$0xff]
    %v171 = vld [vmem:[#allocation7 + $0x50] sm:$0xff]
    %v172 = vld [vmem:[#allocation7 + $0x58] sm:$0xff]
    %v173 = vld [vmem:[#allocation7 + $0x60] sm:$0xff]
    %v174 = vld [vmem:[#allocation7 + $0x68] sm:$0xff]
    %v175 = vld [vmem:[#allocation7 + $0x70] sm:$0xff]
    %v176 = vld [vmem:[#allocation7 + $0x78] sm:$0xff]
    %v177 = vld [vmem:[#allocation7 + $0x80] sm:$0xff]
    %v178 = vld [vmem:[#allocation7 + $0x88] sm:$0xff]
    %v179 = vld [vmem:[#allocation7 + $0x90] sm:$0xff]
    %v180 = vld [vmem:[#allocation7 + $0x98] sm:$0xff]
    %v181 = vld [vmem:[#allocation7 + $0xa0] sm:$0xff]
    %v182 = vld [vmem:[#allocation7 + $0xa8] sm:$0xff]
    %v183 = vld [vmem:[#allocation7 + $0xb0] sm:$0xff]
    %v184 = vld [vmem:[#allocation7 + $0xb8] sm:$0xff]
    %v185 = vld [vmem:[#allocation7 + $0xc0] sm:$0xff]
    %v186 = vld [vmem:[#allocation7 + $0xc8] sm:$0xff]
    %v187 = vld [vmem:[#allocation7 + $0xd0] sm:$0xff]
    %v188 = vld [vmem:[#allocation7 + $0xd8] sm:$0xff]
    %v189 = vld [vmem:[#allocation7 + $0xe0] sm:$0xff]
    %v190 = vld [vmem:[#allocation7 + $0xe8] sm:$0xff]
    %v191 = vld [vmem:[#allocation7 + $0xf0] sm:$0xff]
    %v192 = vld [vmem:[#allocation7 + $0xf8] sm:$0xff]
    %v193 = vld [vmem:[#allocation7 + $0x100] sm:$0xff]
    %v194 = vld [vmem:[#allocation7 + $0x108] sm:$0xff]
    %v195 = vld [vmem:[#allocation7 + $0x110] sm:$0xff]
    %v196 = vld [vmem:[#allocation7 + $0x118] sm:$0xff]
    %v197 = vld [vmem:[#allocation7 + $0x120] sm:$0xff]
    %v198 = vld [vmem:[#allocation7 + $0x128] sm:$0xff]
    %v199 = vld [vmem:[#allocation7 + $0x130] sm:$0xff]
    %v200 = vld [vmem:[#allocation7 + $0x138] sm:$0xff]
    %v201 = vld [vmem:[#allocation7 + $0x140] sm:$0xff]
    %v202 = vld [vmem:[#allocation7 + $0x148] sm:$0xff]
    %v203 = vld [vmem:[#allocation7 + $0x150] sm:$0xff]
    %v204 = vld [vmem:[#allocation7 + $0x158] sm:$0xff]
    %v205 = vld [vmem:[#allocation7 + $0x160] sm:$0xff]
    %v206 = vld [vmem:[#allocation7 + $0x168] sm:$0xff]
    %v207 = vld [vmem:[#allocation7 + $0x170] sm:$0xff]
    %v208 = vld [vmem:[#allocation7 + $0x178] sm:$0xff]
    %v209 = vld [vmem:[#allocation7 + $0x180] sm:$0xff]
    %v210 = vld [vmem:[#allocation7 + $0x188] sm:$0xff]
    %v211 = vld [vmem:[#allocation7 + $0x190] sm:$0xff]
    %v212 = vld [vmem:[#allocation7 + $0x198] sm:$0xff]
    %v213 = vld [vmem:[#allocation7 + $0x1a0] sm:$0xff]
    %v214 = vld [vmem:[#allocation7 + $0x1a8] sm:$0xff]
    %v215 = vld [vmem:[#allocation7 + $0x1b0] sm:$0xff]
    %v216 = vld [vmem:[#allocation7 + $0x1b8] sm:$0xff]
    %v217 = vld [vmem:[#allocation7 + $0x1c0] sm:$0xff]
    %v218 = vld [vmem:[#allocation7 + $0x1c8] sm:$0xff]
    %v219 = vld [vmem:[#allocation7 + $0x1d0] sm:$0xff]
    %v220 = vld [vmem:[#allocation7 + $0x1d8] sm:$0xff]
    %v221 = vld [vmem:[#allocation7 + $0x1e0] sm:$0xff]
    %v222 = vld [vmem:[#allocation7 + $0x1e8] sm:$0xff]
    %v223 = vld [vmem:[#allocation7 + $0x1f0] sm:$0xff]
    %v224 = vld [vmem:[#allocation7 + $0x1f8] sm:$0xff]
    %v225 = vld [vmem:[#allocation7 + $0x200] sm:$0xff]
    %v226 = vld [vmem:[#allocation7 + $0x208] sm:$0xff]
    %v227 = vld [vmem:[#allocation7 + $0x210] sm:$0xff]
    %v228 = vld [vmem:[#allocation7 + $0x218] sm:$0xff]
    %v229 = vld [vmem:[#allocation7 + $0x220] sm:$0xff]
    %v230 = vld [vmem:[#allocation7 + $0x228] sm:$0xff]
    %v231 = vld [vmem:[#allocation7 + $0x230] sm:$0xff]
    %v232 = vld [vmem:[#allocation7 + $0x238] sm:$0xff]
    %v233 = vld [vmem:[#allocation7 + $0x240] sm:$0xff]
    %v234 = vld [vmem:[#allocation7 + $0x248] sm:$0xff]
    %v235 = vld [vmem:[#allocation7 + $0x250] sm:$0xff]
    %v236 = vld [vmem:[#allocation7 + $0x258] sm:$0xff]
    %v237 = vld [vmem:[#allocation7 + $0x260] sm:$0xff]
    %v238 = vld [vmem:[#allocation7 + $0x268] sm:$0xff]
    %v239 = vld [vmem:[#allocation7 + $0x270] sm:$0xff]
    %v240 = vld [vmem:[#allocation7 + $0x278] sm:$0xff]
    %v241 = vld [vmem:[#allocation7 + $0x280] sm:$0xff]
    %v242 = vld [vmem:[#allocation7 + $0x288] sm:$0xff]
    %v243 = vld [vmem:[#allocation7 + $0x290] sm:$0xff]
    %v244 = vld [vmem:[#allocation7 + $0x298] sm:$0xff]
    %v245 = vld [vmem:[#allocation7 + $0x2a0] sm:$0xff]
    %v246 = vld [vmem:[#allocation7 + $0x2a8] sm:$0xff]
    %v247 = vld [vmem:[#allocation7 + $0x2b0] sm:$0xff]
    %v248 = vld [vmem:[#allocation7 + $0x2b8] sm:$0xff]
    %v249 = vld [vmem:[#allocation7 + $0x2c0] sm:$0xff]
    %v250 = vld [vmem:[#allocation7 + $0x2c8] sm:$0xff]
    %v251 = vld [vmem:[#allocation7 + $0x2d0] sm:$0xff]
    %v252 = vld [vmem:[#allocation7 + $0x2d8] sm:$0xff]
    %v253 = vld [vmem:[#allocation7 + $0x2e0] sm:$0xff]
    %v254 = vld [vmem:[#allocation7 + $0x2e8] sm:$0xff]
    %v255 = vld [vmem:[#allocation7 + $0x2f0] sm:$0xff]
    %v256 = vld [vmem:[#allocation7 + $0x2f8] sm:$0xff]
    %v257 = vmul.f32 %v65, %v161
    %v258 = vmul.f32 %v66, %v162
    %v259 = vmul.f32 %v67, %v163
    %v260 = vmul.f32 %v68, %v164
    %v261 = vmul.f32 %v69, %v165
    %v262 = vmul.f32 %v70, %v166
    %v263 = vmul.f32 %v71, %v167
    %v264 = vmul.f32 %v72, %v168
    %v265 = vmul.f32 %v73, %v169
    %v266 = vmul.f32 %v74, %v170
    %v267 = vmul.f32 %v75, %v171
    %v268 = vmul.f32 %v76, %v172
    %v269 = vmul.f32 %v77, %v173
    %v270 = vmul.f32 %v78, %v174
    %v271 = vmul.f32 %v79, %v175
    %v272 = vmul.f32 %v80, %v176
    %v273 = vmul.f32 %v81, %v177
    %v274 = vmul.f32 %v82, %v178
    %v275 = vmul.f32 %v83, %v179
    %v276 = vmul.f32 %v84, %v180
    %v277 = vmul.f32 %v85, %v181
    %v278 = vmul.f32 %v86, %v182
    %v279 = vmul.f32 %v87, %v183
    %v280 = vmul.f32 %v88, %v184
    %v281 = vmul.f32 %v89, %v185
    %v282 = vmul.f32 %v90, %v186
    %v283 = vmul.f32 %v91, %v187
    %v284 = vmul.f32 %v92, %v188
    %v285 = vmul.f32 %v93, %v189
    %v286 = vmul.f32 %v94, %v190
    %v287 = vmul.f32 %v95, %v191
    %v288 = vmul.f32 %v96, %v192
    %v289 = vmul.f32 %v97, %v193
    %v290 = vmul.f32 %v98, %v194
    %v291 = vmul.f32 %v99, %v195
    %v292 = vmul.f32 %v100, %v196
    %v293 = vmul.f32 %v101, %v197
    %v294 = vmul.f32 %v102, %v198
    %v295 = vmul.f32 %v103, %v199
    %v296 = vmul.f32 %v104, %v200
    %v297 = vmul.f32 %v105, %v201
    %v298 = vmul.f32 %v106, %v202
    %v299 = vmul.f32 %v107, %v203
    %v300 = vmul.f32 %v108, %v204
    %v301 = vmul.f32 %v109, %v205
    %v302 = vmul.f32 %v110, %v206
    %v303 = vmul.f32 %v111, %v207
    %v304 = vmul.f32 %v112, %v208
    %v305 = vmul.f32 %v113, %v209
    %v306 = vmul.f32 %v114, %v210
    %v307 = vmul.f32 %v115, %v211
    %v308 = vmul.f32 %v116, %v212
    %v309 = vmul.f32 %v117, %v213
    %v310 = vmul.f32 %v118, %v214
    %v311 = vmul.f32 %v119, %v215
    %v312 = vmul.f32 %v120, %v216
    %v313 = vmul.f32 %v121, %v217
    %v314 = vmul.f32 %v122, %v218
    %v315 = vmul.f32 %v123, %v219
    %v316 = vmul.f32 %v124, %v220
    %v317 = vmul.f32 %v125, %v221
    %v318 = vmul.f32 %v126, %v222
    %v319 = vmul.f32 %v127, %v223
    %v320 = vmul.f32 %v128, %v224
    %v321 = vmul.f32 %v129, %v225
    %v322 = vmul.f32 %v130, %v226
    %v323 = vmul.f32 %v131, %v227
    %v324 = vmul.f32 %v132, %v228
    %v325 = vmul.f32 %v133, %v229
    %v326 = vmul.f32 %v134, %v230
    %v327 = vmul.f32 %v135, %v231
    %v328 = vmul.f32 %v136, %v232
    %v329 = vmul.f32 %v137, %v233
    %v330 = vmul.f32 %v138, %v234
    %v331 = vmul.f32 %v139, %v235
    %v332 = vmul.f32 %v140, %v236
    %v333 = vmul.f32 %v141, %v237
    %v334 = vmul.f32 %v142, %v238
    %v335 = vmul.f32 %v143, %v239
    %v336 = vmul.f32 %v144, %v240
    %v337 = vmul.f32 %v145, %v241
    %v338 = vmul.f32 %v146, %v242
    %v339 = vmul.f32 %v147, %v243
    %v340 = vmul.f32 %v148, %v244
    %v341 = vmul.f32 %v149, %v245
    %v342 = vmul.f32 %v150, %v246
    %v343 = vmul.f32 %v151, %v247
    %v344 = vmul.f32 %v152, %v248
    %v345 = vmul.f32 %v153, %v249
    %v346 = vmul.f32 %v154, %v250
    %v347 = vmul.f32 %v155, %v251
    %v348 = vmul.f32 %v156, %v252
    %v349 = vmul.f32 %v157, %v253
    %v350 = vmul.f32 %v158, %v254
    %v351 = vmul.f32 %v159, %v255
    %v352 = vmul.f32 %v160, %v256
    %v353 = vld [vmem:[#allocation5] sm:$0xff]
    %v354 = vld [vmem:[#allocation5 + $0x8] sm:$0xff]
    %v355 = vld [vmem:[#allocation5 + $0x10] sm:$0xff]
    %v356 = vld [vmem:[#allocation5 + $0x18] sm:$0xff]
    %v357 = vld [vmem:[#allocation5 + $0x20] sm:$0xff]
    %v358 = vld [vmem:[#allocation5 + $0x28] sm:$0xff]
    %v359 = vld [vmem:[#allocation5 + $0x30] sm:$0xff]
    %v360 = vld [vmem:[#allocation5 + $0x38] sm:$0xff]
    %v361 = vld [vmem:[#allocation5 + $0x40] sm:$0xff]
    %v362 = vld [vmem:[#allocation5 + $0x48] sm:$0xff]
    %v363 = vld [vmem:[#allocation5 + $0x50] sm:$0xff]
    %v364 = vld [vmem:[#allocation5 + $0x58] sm:$0xff]
    %v365 = vld [vmem:[#allocation5 + $0x60] sm:$0xff]
    %v366 = vld [vmem:[#allocation5 + $0x68] sm:$0xff]
    %v367 = vld [vmem:[#allocation5 + $0x70] sm:$0xff]
    %v368 = vld [vmem:[#allocation5 + $0x78] sm:$0xff]
    %v369 = vld [vmem:[#allocation5 + $0x80] sm:$0xff]
    %v370 = vld [vmem:[#allocation5 + $0x88] sm:$0xff]
    %v371 = vld [vmem:[#allocation5 + $0x90] sm:$0xff]
    %v372 = vld [vmem:[#allocation5 + $0x98] sm:$0xff]
    %v373 = vld [vmem:[#allocation5 + $0xa0] sm:$0xff]
    %v374 = vld [vmem:[#allocation5 + $0xa8] sm:$0xff]
    %v375 = vld [vmem:[#allocation5 + $0xb0] sm:$0xff]
    %v376 = vld [vmem:[#allocation5 + $0xb8] sm:$0xff]
    %v377 = vld [vmem:[#allocation5 + $0xc0] sm:$0xff]
    %v378 = vld [vmem:[#allocation5 + $0xc8] sm:$0xff]
    %v379 = vld [vmem:[#allocation5 + $0xd0] sm:$0xff]
    %v380 = vld [vmem:[#allocation5 + $0xd8] sm:$0xff]
    %v381 = vld [vmem:[#allocation5 + $0xe0] sm:$0xff]
    %v382 = vld [vmem:[#allocation5 + $0xe8] sm:$0xff]
    %v383 = vld [vmem:[#allocation5 + $0xf0] sm:$0xff]
    %v384 = vld [vmem:[#allocation5 + $0xf8] sm:$0xff]
    %v385 = vld [vmem:[#allocation5 + $0x100] sm:$0xff]
    %v386 = vld [vmem:[#allocation5 + $0x108] sm:$0xff]
    %v387 = vld [vmem:[#allocation5 + $0x110] sm:$0xff]
    %v388 = vld [vmem:[#allocation5 + $0x118] sm:$0xff]
    %v389 = vld [vmem:[#allocation5 + $0x120] sm:$0xff]
    %v390 = vld [vmem:[#allocation5 + $0x128] sm:$0xff]
    %v391 = vld [vmem:[#allocation5 + $0x130] sm:$0xff]
    %v392 = vld [vmem:[#allocation5 + $0x138] sm:$0xff]
    %v393 = vld [vmem:[#allocation5 + $0x140] sm:$0xff]
    %v394 = vld [vmem:[#allocation5 + $0x148] sm:$0xff]
    %v395 = vld [vmem:[#allocation5 + $0x150] sm:$0xff]
    %v396 = vld [vmem:[#allocation5 + $0x158] sm:$0xff]
    %v397 = vld [vmem:[#allocation5 + $0x160] sm:$0xff]
    %v398 = vld [vmem:[#allocation5 + $0x168] sm:$0xff]
    %v399 = vld [vmem:[#allocation5 + $0x170] sm:$0xff]
    %v400 = vld [vmem:[#allocation5 + $0x178] sm:$0xff]
    %v401 = vld [vmem:[#allocation5 + $0x180] sm:$0xff]
    %v402 = vld [vmem:[#allocation5 + $0x188] sm:$0xff]
    %v403 = vld [vmem:[#allocation5 + $0x190] sm:$0xff]
    %v404 = vld [vmem:[#allocation5 + $0x198] sm:$0xff]
    %v405 = vld [vmem:[#allocation5 + $0x1a0] sm:$0xff]
    %v406 = vld [vmem:[#allocation5 + $0x1a8] sm:$0xff]
    %v407 = vld [vmem:[#allocation5 + $0x1b0] sm:$0xff]
    %v408 = vld [vmem:[#allocation5 + $0x1b8] sm:$0xff]
    %v409 = vld [vmem:[#allocation5 + $0x1c0] sm:$0xff]
    %v410 = vld [vmem:[#allocation5 + $0x1c8] sm:$0xff]
    %v411 = vld [vmem:[#allocation5 + $0x1d0] sm:$0xff]
    %v412 = vld [vmem:[#allocation5 + $0x1d8] sm:$0xff]
    %v413 = vld [vmem:[#allocation5 + $0x1e0] sm:$0xff]
    %v414 = vld [vmem:[#allocation5 + $0x1e8] sm:$0xff]
    %v415 = vld [vmem:[#allocation5 + $0x1f0] sm:$0xff]
    %v416 = vld [vmem:[#allocation5 + $0x1f8] sm:$0xff]
    %v417 = vld [vmem:[#allocation5 + $0x200] sm:$0xff]
    %v418 = vld [vmem:[#allocation5 + $0x208] sm:$0xff]
    %v419 = vld [vmem:[#allocation5 + $0x210] sm:$0xff]
    %v420 = vld [vmem:[#allocation5 + $0x218] sm:$0xff]
    %v421 = vld [vmem:[#allocation5 + $0x220] sm:$0xff]
    %v422 = vld [vmem:[#allocation5 + $0x228] sm:$0xff]
    %v423 = vld [vmem:[#allocation5 + $0x230] sm:$0xff]
    %v424 = vld [vmem:[#allocation5 + $0x238] sm:$0xff]
    %v425 = vld [vmem:[#allocation5 + $0x240] sm:$0xff]
    %v426 = vld [vmem:[#allocation5 + $0x248] sm:$0xff]
    %v427 = vld [vmem:[#allocation5 + $0x250] sm:$0xff]
    %v428 = vld [vmem:[#allocation5 + $0x258] sm:$0xff]
    %v429 = vld [vmem:[#allocation5 + $0x260] sm:$0xff]
    %v430 = vld [vmem:[#allocation5 + $0x268] sm:$0xff]
    %v431 = vld [vmem:[#allocation5 + $0x270] sm:$0xff]
    %v432 = vld [vmem:[#allocation5 + $0x278] sm:$0xff]
    %v433 = vld [vmem:[#allocation5 + $0x280] sm:$0xff]
    %v434 = vld [vmem:[#allocation5 + $0x288] sm:$0xff]
    %v435 = vld [vmem:[#allocation5 + $0x290] sm:$0xff]
    %v436 = vld [vmem:[#allocation5 + $0x298] sm:$0xff]
    %v437 = vld [vmem:[#allocation5 + $0x2a0] sm:$0xff]
    %v438 = vld [vmem:[#allocation5 + $0x2a8] sm:$0xff]
    %v439 = vld [vmem:[#allocation5 + $0x2b0] sm:$0xff]
    %v440 = vld [vmem:[#allocation5 + $0x2b8] sm:$0xff]
    %v441 = vld [vmem:[#allocation5 + $0x2c0] sm:$0xff]
    %v442 = vld [vmem:[#allocation5 + $0x2c8] sm:$0xff]
    %v443 = vld [vmem:[#allocation5 + $0x2d0] sm:$0xff]
    %v444 = vld [vmem:[#allocation5 + $0x2d8] sm:$0xff]
    %v445 = vld [vmem:[#allocation5 + $0x2e0] sm:$0xff]
    %v446 = vld [vmem:[#allocation5 + $0x2e8] sm:$0xff]
    %v447 = vld [vmem:[#allocation5 + $0x2f0] sm:$0xff]
    %v448 = vld [vmem:[#allocation5 + $0x2f8] sm:$0xff]
    %v449 = vadd.f32 %v257, %v353
    %v450 = vadd.f32 %v258, %v354
    %v451 = vadd.f32 %v259, %v355
    %v452 = vadd.f32 %v260, %v356
    %v453 = vadd.f32 %v261, %v357
    %v454 = vadd.f32 %v262, %v358
    %v455 = vadd.f32 %v263, %v359
    %v456 = vadd.f32 %v264, %v360
    %v457 = vadd.f32 %v265, %v361
    %v458 = vadd.f32 %v266, %v362
    %v459 = vadd.f32 %v267, %v363
    %v460 = vadd.f32 %v268, %v364
    %v461 = vadd.f32 %v269, %v365
    %v462 = vadd.f32 %v270, %v366
    %v463 = vadd.f32 %v271, %v367
    %v464 = vadd.f32 %v272, %v368
    %v465 = vadd.f32 %v273, %v369
    %v466 = vadd.f32 %v274, %v370
    %v467 = vadd.f32 %v275, %v371
    %v468 = vadd.f32 %v276, %v372
    %v469 = vadd.f32 %v277, %v373
    %v470 = vadd.f32 %v278, %v374
    %v471 = vadd.f32 %v279, %v375
    %v472 = vadd.f32 %v280, %v376
    %v473 = vadd.f32 %v281, %v377
    %v474 = vadd.f32 %v282, %v378
    %v475 = vadd.f32 %v283, %v379
    %v476 = vadd.f32 %v284, %v380
    %v477 = vadd.f32 %v285, %v381
    %v478 = vadd.f32 %v286, %v382
    %v479 = vadd.f32 %v287, %v383
    %v480 = vadd.f32 %v288, %v384
    %v481 = vadd.f32 %v289, %v385
    %v482 = vadd.f32 %v290, %v386
    %v483 = vadd.f32 %v291, %v387
    %v484 = vadd.f32 %v292, %v388
    %v485 = vadd.f32 %v293, %v389
    %v486 = vadd.f32 %v294, %v390
    %v487 = vadd.f32 %v295, %v391
    %v488 = vadd.f32 %v296, %v392
    %v489 = vadd.f32 %v297, %v393
    %v490 = vadd.f32 %v298, %v394
    %v491 = vadd.f32 %v299, %v395
    %v492 = vadd.f32 %v300, %v396
    %v493 = vadd.f32 %v301, %v397
    %v494 = vadd.f32 %v302, %v398
    %v495 = vadd.f32 %v303, %v399
    %v496 = vadd.f32 %v304, %v400
    %v497 = vadd.f32 %v305, %v401
    %v498 = vadd.f32 %v306, %v402
    %v499 = vadd.f32 %v307, %v403
    %v500 = vadd.f32 %v308, %v404
    %v501 = vadd.f32 %v309, %v405
    %v502 = vadd.f32 %v310, %v406
    %v503 = vadd.f32 %v311, %v407
    %v504 = vadd.f32 %v312, %v408
    %v505 = vadd.f32 %v313, %v409
    %v506 = vadd.f32 %v314, %v410
    %v507 = vadd.f32 %v315, %v411
    %v508 = vadd.f32 %v316, %v412
    %v509 = vadd.f32 %v317, %v413
    %v510 = vadd.f32 %v318, %v414
    %v511 = vadd.f32 %v319, %v415
    %v512 = vadd.f32 %v320, %v416
    %v513 = vadd.f32 %v321, %v417
    %v514 = vadd.f32 %v322, %v418
    %v515 = vadd.f32 %v323, %v419
    %v516 = vadd.f32 %v324, %v420
    %v517 = vadd.f32 %v325, %v421
    %v518 = vadd.f32 %v326, %v422
    %v519 = vadd.f32 %v327, %v423
    %v520 = vadd.f32 %v328, %v424
    %v521 = vadd.f32 %v329, %v425
    %v522 = vadd.f32 %v330, %v426
    %v523 = vadd.f32 %v331, %v427
    %v524 = vadd.f32 %v332, %v428
    %v525 = vadd.f32 %v333, %v429
    %v526 = vadd.f32 %v334, %v430
    %v527 = vadd.f32 %v335, %v431
    %v528 = vadd.f32 %v336, %v432
    %v529 = vadd.f32 %v337, %v433
    %v530 = vadd.f32 %v338, %v434
    %v531 = vadd.f32 %v339, %v435
    %v532 = vadd.f32 %v340, %v436
    %v533 = vadd.f32 %v341, %v437
    %v534 = vadd.f32 %v342, %v438
    %v535 = vadd.f32 %v343, %v439
    %v536 = vadd.f32 %v344, %v440
    %v537 = vadd.f32 %v345, %v441
    %v538 = vadd.f32 %v346, %v442
    %v539 = vadd.f32 %v347, %v443
    %v540 = vadd.f32 %v348, %v444
    %v541 = vadd.f32 %v349, %v445
    %v542 = vadd.f32 %v350, %v446
    %v543 = vadd.f32 %v351, %v447
    %v544 = vadd.f32 %v352, %v448
    %545 = vst [vmem:[#allocation8] sm:$0xff] %v449
    %546 = vst [vmem:[#allocation8 + $0x8] sm:$0xff] %v450
    %547 = vst [vmem:[#allocation8 + $0x10] sm:$0xff] %v451
    %548 = vst [vmem:[#allocation8 + $0x18] sm:$0xff] %v452
    %549 = vst [vmem:[#allocation8 + $0x20] sm:$0xff] %v453
    %550 = vst [vmem:[#allocation8 + $0x28] sm:$0xff] %v454
    %551 = vst [vmem:[#allocation8 + $0x30] sm:$0xff] %v455
    %552 = vst [vmem:[#allocation8 + $0x38] sm:$0xff] %v456
    %553 = vst [vmem:[#allocation8 + $0x40] sm:$0xff] %v457
    %554 = vst [vmem:[#allocation8 + $0x48] sm:$0xff] %v458
    %555 = vst [vmem:[#allocation8 + $0x50] sm:$0xff] %v459
    %556 = vst [vmem:[#allocation8 + $0x58] sm:$0xff] %v460
    %557 = vst [vmem:[#allocation8 + $0x60] sm:$0xff] %v461
    %558 = vst [vmem:[#allocation8 + $0x68] sm:$0xff] %v462
    %559 = vst [vmem:[#allocation8 + $0x70] sm:$0xff] %v463
    %560 = vst [vmem:[#allocation8 + $0x78] sm:$0xff] %v464
    %561 = vst [vmem:[#allocation8 + $0x80] sm:$0xff] %v465
    %562 = vst [vmem:[#allocation8 + $0x88] sm:$0xff] %v466
    %563 = vst [vmem:[#allocation8 + $0x90] sm:$0xff] %v467
    %564 = vst [vmem:[#allocation8 + $0x98] sm:$0xff] %v468
    %565 = vst [vmem:[#allocation8 + $0xa0] sm:$0xff] %v469
    %566 = vst [vmem:[#allocation8 + $0xa8] sm:$0xff] %v470
    %567 = vst [vmem:[#allocation8 + $0xb0] sm:$0xff] %v471
    %568 = vst [vmem:[#allocation8 + $0xb8] sm:$0xff] %v472
    %569 = vst [vmem:[#allocation8 + $0xc0] sm:$0xff] %v473
    %570 = vst [vmem:[#allocation8 + $0xc8] sm:$0xff] %v474
    %571 = vst [vmem:[#allocation8 + $0xd0] sm:$0xff] %v475
    %572 = vst [vmem:[#allocation8 + $0xd8] sm:$0xff] %v476
    %573 = vst [vmem:[#allocation8 + $0xe0] sm:$0xff] %v477
    %574 = vst [vmem:[#allocation8 + $0xe8] sm:$0xff] %v478
    %575 = vst [vmem:[#allocation8 + $0xf0] sm:$0xff] %v479
    %576 = vst [vmem:[#allocation8 + $0xf8] sm:$0xff] %v480
    %577 = vst [vmem:[#allocation8 + $0x100] sm:$0xff] %v481
    %578 = vst [vmem:[#allocation8 + $0x108] sm:$0xff] %v482
    %579 = vst [vmem:[#allocation8 + $0x110] sm:$0xff] %v483
    %580 = vst [vmem:[#allocation8 + $0x118] sm:$0xff] %v484
    %581 = vst [vmem:[#allocation8 + $0x120] sm:$0xff] %v485
    %582 = vst [vmem:[#allocation8 + $0x128] sm:$0xff] %v486
    %583 = vst [vmem:[#allocation8 + $0x130] sm:$0xff] %v487
    %584 = vst [vmem:[#allocation8 + $0x138] sm:$0xff] %v488
    %585 = vst [vmem:[#allocation8 + $0x140] sm:$0xff] %v489
    %586 = vst [vmem:[#allocation8 + $0x148] sm:$0xff] %v490
    %587 = vst [vmem:[#allocation8 + $0x150] sm:$0xff] %v491
    %588 = vst [vmem:[#allocation8 + $0x158] sm:$0xff] %v492
    %589 = vst [vmem:[#allocation8 + $0x160] sm:$0xff] %v493
    %590 = vst [vmem:[#allocation8 + $0x168] sm:$0xff] %v494
    %591 = vst [vmem:[#allocation8 + $0x170] sm:$0xff] %v495
    %592 = vst [vmem:[#allocation8 + $0x178] sm:$0xff] %v496
    %593 = vst [vmem:[#allocation8 + $0x180] sm:$0xff] %v497
    %594 = vst [vmem:[#allocation8 + $0x188] sm:$0xff] %v498
    %595 = vst [vmem:[#allocation8 + $0x190] sm:$0xff] %v499
    %596 = vst [vmem:[#allocation8 + $0x198] sm:$0xff] %v500
    %597 = vst [vmem:[#allocation8 + $0x1a0] sm:$0xff] %v501
    %598 = vst [vmem:[#allocation8 + $0x1a8] sm:$0xff] %v502
    %599 = vst [vmem:[#allocation8 + $0x1b0] sm:$0xff] %v503
    %600 = vst [vmem:[#allocation8 + $0x1b8] sm:$0xff] %v504
    %601 = vst [vmem:[#allocation8 + $0x1c0] sm:$0xff] %v505
    %602 = vst [vmem:[#allocation8 + $0x1c8] sm:$0xff] %v506
    %603 = vst [vmem:[#allocation8 + $0x1d0] sm:$0xff] %v507
    %604 = vst [vmem:[#allocation8 + $0x1d8] sm:$0xff] %v508
    %605 = vst [vmem:[#allocation8 + $0x1e0] sm:$0xff] %v509
    %606 = vst [vmem:[#allocation8 + $0x1e8] sm:$0xff] %v510
    %607 = vst [vmem:[#allocation8 + $0x1f0] sm:$0xff] %v511
    %608 = vst [vmem:[#allocation8 + $0x1f8] sm:$0xff] %v512
    %609 = vst [vmem:[#allocation8 + $0x200] sm:$0xff] %v513
    %610 = vst [vmem:[#allocation8 + $0x208] sm:$0xff] %v514
    %611 = vst [vmem:[#allocation8 + $0x210] sm:$0xff] %v515
    %612 = vst [vmem:[#allocation8 + $0x218] sm:$0xff] %v516
    %613 = vst [vmem:[#allocation8 + $0x220] sm:$0xff] %v517
    %614 = vst [vmem:[#allocation8 + $0x228] sm:$0xff] %v518
    %615 = vst [vmem:[#allocation8 + $0x230] sm:$0xff] %v519
    %616 = vst [vmem:[#allocation8 + $0x238] sm:$0xff] %v520
    %617 = vst [vmem:[#allocation8 + $0x240] sm:$0xff] %v521
    %618 = vst [vmem:[#allocation8 + $0x248] sm:$0xff] %v522
    %619 = vst [vmem:[#allocation8 + $0x250] sm:$0xff] %v523
    %620 = vst [vmem:[#allocation8 + $0x258] sm:$0xff] %v524
    %621 = vst [vmem:[#allocation8 + $0x260] sm:$0xff] %v525
    %622 = vst [vmem:[#allocation8 + $0x268] sm:$0xff] %v526
    %623 = vst [vmem:[#allocation8 + $0x270] sm:$0xff] %v527
    %624 = vst [vmem:[#allocation8 + $0x278] sm:$0xff] %v528
    %625 = vst [vmem:[#allocation8 + $0x280] sm:$0xff] %v529
    %626 = vst [vmem:[#allocation8 + $0x288] sm:$0xff] %v530
    %627 = vst [vmem:[#allocation8 + $0x290] sm:$0xff] %v531
    %628 = vst [vmem:[#allocation8 + $0x298] sm:$0xff] %v532
    %629 = vst [vmem:[#allocation8 + $0x2a0] sm:$0xff] %v533
    %630 = vst [vmem:[#allocation8 + $0x2a8] sm:$0xff] %v534
    %631 = vst [vmem:[#allocation8 + $0x2b0] sm:$0xff] %v535
    %632 = vst [vmem:[#allocation8 + $0x2b8] sm:$0xff] %v536
    %633 = vst [vmem:[#allocation8 + $0x2c0] sm:$0xff] %v537
    %634 = vst [vmem:[#allocation8 + $0x2c8] sm:$0xff] %v538
    %635 = vst [vmem:[#allocation8 + $0x2d0] sm:$0xff] %v539
    %636 = vst [vmem:[#allocation8 + $0x2d8] sm:$0xff] %v540
    %637 = vst [vmem:[#allocation8 + $0x2e0] sm:$0xff] %v541
    %638 = vst [vmem:[#allocation8 + $0x2e8] sm:$0xff] %v542
    %639 = vst [vmem:[#allocation8 + $0x2f0] sm:$0xff] %v543
    %640 = vst [vmem:[#allocation8 + $0x2f8] sm:$0xff] %v544
    %v641 = vpack.c.bf16 %v450, %v449
    %v642 = vpack.c.bf16 %v451, %v451
    %v643 = vpack.c.bf16 %v453, %v452
    %v644 = vpack.c.bf16 %v454, %v454
    %v645 = vpack.c.bf16 %v456, %v455
    %v646 = vpack.c.bf16 %v457, %v457
    %v647 = vpack.c.bf16 %v459, %v458
    %v648 = vpack.c.bf16 %v460, %v460
    %v649 = vpack.c.bf16 %v462, %v461
    %v650 = vpack.c.bf16 %v463, %v463
    %v651 = vpack.c.bf16 %v465, %v464
    %v652 = vpack.c.bf16 %v466, %v466
    %v653 = vpack.c.bf16 %v468, %v467
    %v654 = vpack.c.bf16 %v469, %v469
    %v655 = vpack.c.bf16 %v471, %v470
    %v656 = vpack.c.bf16 %v472, %v472
    %v657 = vpack.c.bf16 %v474, %v473
    %v658 = vpack.c.bf16 %v475, %v475
    %v659 = vpack.c.bf16 %v477, %v476
    %v660 = vpack.c.bf16 %v478, %v478
    %v661 = vpack.c.bf16 %v480, %v479
    %v662 = vpack.c.bf16 %v481, %v481
    %v663 = vpack.c.bf16 %v483, %v482
    %v664 = vpack.c.bf16 %v484, %v484
    %v665 = vpack.c.bf16 %v486, %v485
    %v666 = vpack.c.bf16 %v487, %v487
    %v667 = vpack.c.bf16 %v489, %v488
    %v668 = vpack.c.bf16 %v490, %v490
    %v669 = vpack.c.bf16 %v492, %v491
    %v670 = vpack.c.bf16 %v493, %v493
    %v671 = vpack.c.bf16 %v495, %v494
    %v672 = vpack.c.bf16 %v496, %v496
    %v673 = vpack.c.bf16 %v498, %v497
    %v674 = vpack.c.bf16 %v499, %v499
    %v675 = vpack.c.bf16 %v501, %v500
    %v676 = vpack.c.bf16 %v502, %v502
    %v677 = vpack.c.bf16 %v504, %v503
    %v678 = vpack.c.bf16 %v505, %v505
    %v679 = vpack.c.bf16 %v507, %v506
    %v680 = vpack.c.bf16 %v508, %v508
    %v681 = vpack.c.bf16 %v510, %v509
    %v682 = vpack.c.bf16 %v511, %v511
    %v683 = vpack.c.bf16 %v513, %v512
    %v684 = vpack.c.bf16 %v514, %v514
    %v685 = vpack.c.bf16 %v516, %v515
    %v686 = vpack.c.bf16 %v517, %v517
    %v687 = vpack.c.bf16 %v519, %v518
    %v688 = vpack.c.bf16 %v520, %v520
    %v689 = vpack.c.bf16 %v522, %v521
    %v690 = vpack.c.bf16 %v523, %v523
    %v691 = vpack.c.bf16 %v525, %v524
    %v692 = vpack.c.bf16 %v526, %v526
    %v693 = vpack.c.bf16 %v528, %v527
    %v694 = vpack.c.bf16 %v529, %v529
    %v695 = vpack.c.bf16 %v531, %v530
    %v696 = vpack.c.bf16 %v532, %v532
    %v697 = vpack.c.bf16 %v534, %v533
    %v698 = vpack.c.bf16 %v535, %v535
    %v699 = vpack.c.bf16 %v537, %v536
    %v700 = vpack.c.bf16 %v538, %v538
    %v701 = vpack.c.bf16 %v540, %v539
    %v702 = vpack.c.bf16 %v541, %v541
    %v703 = vpack.c.bf16 %v543, %v542
    %v704 = vpack.c.bf16 %v544, %v544
    %705 = vst [vmem:[#allocation9] sm:$0xff] %v641
    %706 = vst [vmem:[#allocation9 + $0x8] sm:$0xf] %v642
    %707 = vst [vmem:[#allocation9 + $0xc] sm:$0xff] %v643
    %708 = vst [vmem:[#allocation9 + $0x14] sm:$0xf] %v644
    %709 = vst [vmem:[#allocation9 + $0x18] sm:$0xff] %v645
    %710 = vst [vmem:[#allocation9 + $0x20] sm:$0xf] %v646
    %711 = vst [vmem:[#allocation9 + $0x24] sm:$0xff] %v647
    %712 = vst [vmem:[#allocation9 + $0x2c] sm:$0xf] %v648
    %713 = vst [vmem:[#allocation9 + $0x30] sm:$0xff] %v649
    %714 = vst [vmem:[#allocation9 + $0x38] sm:$0xf] %v650
    %715 = vst [vmem:[#allocation9 + $0x3c] sm:$0xff] %v651
    %716 = vst [vmem:[#allocation9 + $0x44] sm:$0xf] %v652
    %717 = vst [vmem:[#allocation9 + $0x48] sm:$0xff] %v653
    %718 = vst [vmem:[#allocation9 + $0x50] sm:$0xf] %v654
    %719 = vst [vmem:[#allocation9 + $0x54] sm:$0xff] %v655
    %720 = vst [vmem:[#allocation9 + $0x5c] sm:$0xf] %v656
    %721 = vst [vmem:[#allocation9 + $0x60] sm:$0xff] %v657
    %722 = vst [vmem:[#allocation9 + $0x68] sm:$0xf] %v658
    %723 = vst [vmem:[#allocation9 + $0x6c] sm:$0xff] %v659
    %724 = vst [vmem:[#allocation9 + $0x74] sm:$0xf] %v660
    %725 = vst [vmem:[#allocation9 + $0x78] sm:$0xff] %v661
    %726 = vst [vmem:[#allocation9 + $0x80] sm:$0xf] %v662
    %727 = vst [vmem:[#allocation9 + $0x84] sm:$0xff] %v663
    %728 = vst [vmem:[#allocation9 + $0x8c] sm:$0xf] %v664
    %729 = vst [vmem:[#allocation9 + $0x90] sm:$0xff] %v665
    %730 = vst [vmem:[#allocation9 + $0x98] sm:$0xf] %v666
    %731 = vst [vmem:[#allocation9 + $0x9c] sm:$0xff] %v667
    %732 = vst [vmem:[#allocation9 + $0xa4] sm:$0xf] %v668
    %733 = vst [vmem:[#allocation9 + $0xa8] sm:$0xff] %v669
    %734 = vst [vmem:[#allocation9 + $0xb0] sm:$0xf] %v670
    %735 = vst [vmem:[#allocation9 + $0xb4] sm:$0xff] %v671
    %736 = vst [vmem:[#allocation9 + $0xbc] sm:$0xf] %v672
    %737 = vst [vmem:[#allocation9 + $0xc0] sm:$0xff] %v673
    %738 = vst [vmem:[#allocation9 + $0xc8] sm:$0xf] %v674
    %739 = vst [vmem:[#allocation9 + $0xcc] sm:$0xff] %v675
    %740 = vst [vmem:[#allocation9 + $0xd4] sm:$0xf] %v676
    %741 = vst [vmem:[#allocation9 + $0xd8] sm:$0xff] %v677
    %742 = vst [vmem:[#allocation9 + $0xe0] sm:$0xf] %v678
    %743 = vst [vmem:[#allocation9 + $0xe4] sm:$0xff] %v679
    %744 = vst [vmem:[#allocation9 + $0xec] sm:$0xf] %v680
    %745 = vst [vmem:[#allocation9 + $0xf0] sm:$0xff] %v681
    %746 = vst [vmem:[#allocation9 + $0xf8] sm:$0xf] %v682
    %747 = vst [vmem:[#allocation9 + $0xfc] sm:$0xff] %v683
    %748 = vst [vmem:[#allocation9 + $0x104] sm:$0xf] %v684
    %749 = vst [vmem:[#allocation9 + $0x108] sm:$0xff] %v685
    %750 = vst [vmem:[#allocation9 + $0x110] sm:$0xf] %v686
    %751 = vst [vmem:[#allocation9 + $0x114] sm:$0xff] %v687
    %752 = vst [vmem:[#allocation9 + $0x11c] sm:$0xf] %v688
    %753 = vst [vmem:[#allocation9 + $0x120] sm:$0xff] %v689
    %754 = vst [vmem:[#allocation9 + $0x128] sm:$0xf] %v690
    %755 = vst [vmem:[#allocation9 + $0x12c] sm:$0xff] %v691
    %756 = vst [vmem:[#allocation9 + $0x134] sm:$0xf] %v692
    %757 = vst [vmem:[#allocation9 + $0x138] sm:$0xff] %v693
    %758 = vst [vmem:[#allocation9 + $0x140] sm:$0xf] %v694
    %759 = vst [vmem:[#allocation9 + $0x144] sm:$0xff] %v695
    %760 = vst [vmem:[#allocation9 + $0x14c] sm:$0xf] %v696
    %761 = vst [vmem:[#allocation9 + $0x150] sm:$0xff] %v697
    %762 = vst [vmem:[#allocation9 + $0x158] sm:$0xf] %v698
    %763 = vst [vmem:[#allocation9 + $0x15c] sm:$0xff] %v699
    %764 = vst [vmem:[#allocation9 + $0x164] sm:$0xf] %v700
    %765 = vst [vmem:[#allocation9 + $0x168] sm:$0xff] %v701
    %766 = vst [vmem:[#allocation9 + $0x170] sm:$0xf] %v702
    %767 = vst [vmem:[#allocation9 + $0x174] sm:$0xff] %v703
    %768 = vst [vmem:[#allocation9 + $0x17c] sm:$0xf] %v704
    // Predicated region
    $region26: #{tpu_custom_call.1} parent=1 // pred_check
      _
    $region27: #{tpu_custom_call.1} parent=1 // pred_check_branch
      %770 = sbr.rel (0) target = $region29
    $region28: #{tpu_custom_call.1} parent=1 // pred_region
      %772 = vsyncadd [#allocation4], 0
      %s773 = sshll.u32 [#allocation8], 4
      %s774 = int_to_ptr.vmem [resolvable:$true] %s773
      %s775 = sshll.u32 %s3, 4
      %s776 = int_to_ptr.hbm [resolvable:$true] %s775
      %781 = dma.vmem_to_hbm [thread:$0]  %s774, 12288, %s776, [#allocation4], 384, 384, 24
    $region29: #{tpu_custom_call.1} parent=1 // pred_fallthru
      _
    // Predicated region
    $region30: #{tpu_custom_call.1} parent=1 // pred_check
      _
    $region31: #{tpu_custom_call.1} parent=1 // pred_check_branch
      %783 = sbr.rel (0) target = $region33
    $region32: #{tpu_custom_call.1} parent=1 // pred_region
      %785 = vsyncadd [#allocation10], 0
      %s786 = sshll.u32 [#allocation9], 4
      %s787 = int_to_ptr.vmem [resolvable:$true] %s786
      %s788 = sshll.u32 %s4, 4
      %s789 = int_to_ptr.hbm [resolvable:$true] %s788
      %794 = dma.vmem_to_hbm [thread:$0]  %s787, 6144, %s789, [#allocation10], 192, 192, 12
    $region33: #{tpu_custom_call.1} parent=1 // pred_fallthru
      _
    // Predicated region
    $region34: #{tpu_custom_call.1} parent=1 // pred_check
      _
    $region35: #{tpu_custom_call.1} parent=1 // pred_check_branch
      %796 = sbr.rel (0) target = $region37
    $region36: #{tpu_custom_call.1} parent=1 // pred_region
      %798 = dma.done [#allocation4], 12288
    $region37: #{tpu_custom_call.1} parent=1 // pred_fallthru
      _
    // Predicated region
    $region38: #{tpu_custom_call.1} parent=1 // pred_check
      _
    $region39: #{tpu_custom_call.1} parent=1 // pred_check_branch
      %800 = sbr.rel (0) target = $region41
    $region40: #{tpu_custom_call.1} parent=1 // pred_region
      %802 = dma.done [#allocation10], 6144
    $region41: #{tpu_custom_call.1} parent=1 // pred_fallthru
      _
    %803 = vsyncpa [#allocation3], 1
    %804 = vsyncpa [#allocation6], 1
    %805 = vsyncpa [#allocation4], 1
    %806 = vsyncpa [#allocation10], 1

</llo_original>
